<compile_context>
chip_gen: v7x
topology: tpu7x:2x2x1
jax: 0.10.0
libtpu: 0.0.40
codegen_flags: <defaults>
</compile_context>

<pallas_src>
import numpy as np
import jax
import jax.numpy as jnp
from jax.experimental import pallas as pl
from jax.experimental.pallas import tpu as pltpu


def _fam_kernel(x1_ref, x2_ref, w1_ref, w2_ref, b_ref, o_ref):
    # x1_ref, x2_ref: (C_in, T)   w1_ref, w2_ref: (C_tile, C_in)
    # b_ref: (C_tile, 1)          o_ref: (C_tile, T)
    acc = jnp.dot(w1_ref[...], x1_ref[...], preferred_element_type=jnp.float32)
    acc = acc + jnp.dot(w2_ref[...], x2_ref[...], preferred_element_type=jnp.float32)
    acc = acc + b_ref[...].astype(jnp.float32)
    o_ref[...] = acc.astype(o_ref.dtype)


def _pick_tile(total, cap, align):
    """Largest divisor of `total` that is <= cap and a multiple of `align`;
    falls back to the full extent (full-dim blocks are always legal)."""
    if total <= cap:
        return total
    for t in range(cap, align - 1, -1):
        if total % t == 0 and t % align == 0:
            return t
    return total


def fam_forward(x1, x2, weight, bias):
    """Pallas implementation of FAM.forward.

    x1, x2 : (N, C, H, W)
    weight : (C, 2C, 1, 1)   (PyTorch Conv2d layout)
    bias   : (C,)
    returns: (N, C, H, W)
    """
    n, c, h, w = x1.shape
    assert x2.shape == x1.shape
    hw = h * w

    w2d = weight.reshape(c, 2 * c)
    w1m = w2d[:, :c]          # acts on x1 channels
    w2m = w2d[:, c:]          # acts on x2 channels
    b2 = bias.reshape(c, 1)

    x1f = x1.reshape(n, c, hw)
    x2f = x2.reshape(n, c, hw)

    # Tile sizes: lane-dense HW tiles (multiples of 128), modest VMEM footprint
    # even on v7x (64 MiB physical / 32 MiB scoped default); output-channel
    # tiling only kicks in for large C.
    t_hw = _pick_tile(hw, cap=1024, align=128)
    t_c = _pick_tile(c, cap=512, align=8)
    grid = (n, c // t_c, hw // t_hw)

    itemsize = np.dtype(x1.dtype).itemsize
    flops = 2 * n * c * (2 * c) * hw + n * c * hw
    bytes_accessed = (x1f.size + x2f.size + w2d.size + bias.size
                      + n * c * hw) * itemsize

    out_flat = pl.pallas_call(
        _fam_kernel,
        out_shape=jax.ShapeDtypeStruct((n, c, hw), x1.dtype),
        grid_spec=pltpu.PrefetchScalarGridSpec(
            num_scalar_prefetch=0,
            grid=grid,
            in_specs=[
                pl.BlockSpec((None, c, t_hw), lambda ni, ci, ji: (ni, 0, ji)),
                pl.BlockSpec((None, c, t_hw), lambda ni, ci, ji: (ni, 0, ji)),
                pl.BlockSpec((t_c, c), lambda ni, ci, ji: (ci, 0)),
                pl.BlockSpec((t_c, c), lambda ni, ci, ji: (ci, 0)),
                pl.BlockSpec((t_c, 1), lambda ni, ci, ji: (ci, 0)),
            ],
            out_specs=pl.BlockSpec((None, t_c, t_hw),
                                   lambda ni, ci, ji: (ni, ci, ji)),
        ),
        compiler_params=pltpu.CompilerParams(
            dimension_semantics=("parallel", "parallel", "parallel")),
        cost_estimate=pl.CostEstimate(
            flops=flops, transcendentals=0, bytes_accessed=bytes_accessed),
    )(x1f, x2f, w1m, w2m, b2)

    return out_flat.reshape(n, c, h, w)


def _reference(x1, x2, weight, bias):
    """Pure-JAX transcription of FAM.forward for checking."""
    c = x1.shape[1]
    x_cat = jnp.concatenate([x1, x2], axis=1)
    out = jnp.einsum('oc,nchw->nohw', weight.reshape(c, 2 * c), x_cat,
                     precision=jax.lax.Precision.HIGHEST)
    return out + bias.reshape(1, c, 1, 1)


if __name__ == "__main__":
    key = jax.random.PRNGKey(0)
    k1, k2, k3, k4 = jax.random.split(key, 4)

    N, C, H, W = 2, 4, 16, 16
    x1 = jax.random.normal(k1, (N, C, H, W), dtype=jnp.float32)
    x2 = jax.random.normal(k2, (N, C, H, W), dtype=jnp.float32)
    weight = jax.random.normal(k3, (C, 2 * C, 1, 1), dtype=jnp.float32) * 0.1
    bias = jax.random.normal(k4, (C,), dtype=jnp.float32) * 0.1

    out = jax.block_until_ready(fam_forward(x1, x2, weight, bias))

    ref = _reference(x1, x2, weight, bias)
    assert out.shape == ref.shape == (N, C, H, W), (out.shape, ref.shape)
    assert np.allclose(np.asarray(out), np.asarray(ref), rtol=1e-3, atol=1e-3)

    print("KERNEL_OK")
</pallas_src>

<mosaic_0001>
module attributes {stable_mosaic.version = 11 : i64} {
  func.func @_fam_kernel(%arg0: i32, %arg1: i32, %arg2: i32, %arg3: memref<1x4x256xf32, #tpu.memory_space<vmem>>, %arg4: memref<1x4x256xf32, #tpu.memory_space<vmem>>, %arg5: memref<4x4xf32, #tpu.memory_space<vmem>>, %arg6: memref<4x4xf32, #tpu.memory_space<vmem>>, %arg7: memref<4x1xf32, #tpu.memory_space<vmem>>, %arg8: memref<1x4x256xf32, #tpu.memory_space<vmem>>) attributes {dimension_semantics = [#tpu.dimension_semantics<parallel>, #tpu.dimension_semantics<parallel>, #tpu.dimension_semantics<parallel>], iteration_bounds = array<i64: 2, 1, 1>, scalar_prefetch = 0 : i64, scratch_operands = 0 : i64, tpu.core_type = #tpu.core_type<tc>, window_params = [{transform_indices = @transform_0, window_bounds = array<i64: 1, 4, 256>}, {transform_indices = @transform_1, window_bounds = array<i64: 1, 4, 256>}, {transform_indices = @transform_2, window_bounds = array<i64: 4, 4>}, {transform_indices = @transform_3, window_bounds = array<i64: 4, 4>}, {transform_indices = @transform_4, window_bounds = array<i64: 4, 1>}, {transform_indices = @transform_5, window_bounds = array<i64: 1, 4, 256>}]} {
    %c0 = arith.constant 0 : index
    %c0_0 = arith.constant 0 : index
    %0 = vector.load %arg5[%c0, %c0_0] : memref<4x4xf32, #tpu.memory_space<vmem>>, vector<4x4xf32>
    %c0_1 = arith.constant 0 : index
    %c0_2 = arith.constant 0 : index
    %c0_3 = arith.constant 0 : index
    %1 = vector.load %arg3[%c0_1, %c0_2, %c0_3] : memref<1x4x256xf32, #tpu.memory_space<vmem>>, vector<1x4x256xf32>
    %2 = vector.shape_cast %1 : vector<1x4x256xf32> to vector<4x256xf32>
    %cst = arith.constant dense<0.000000e+00> : vector<4x256xf32>
    %3 = tpu.matmul %0, %2, %cst {dimension_numbers = #tpu.dot_dimension_numbers<[1], [0], [0], [1], [0, 0, 1, 1], [], []>} : vector<4x4xf32>, vector<4x256xf32>, vector<4x256xf32> -> vector<4x256xf32>
    %c0_4 = arith.constant 0 : index
    %c0_5 = arith.constant 0 : index
    %4 = vector.load %arg6[%c0_4, %c0_5] : memref<4x4xf32, #tpu.memory_space<vmem>>, vector<4x4xf32>
    %c0_6 = arith.constant 0 : index
    %c0_7 = arith.constant 0 : index
    %c0_8 = arith.constant 0 : index
    %5 = vector.load %arg4[%c0_6, %c0_7, %c0_8] : memref<1x4x256xf32, #tpu.memory_space<vmem>>, vector<1x4x256xf32>
    %6 = vector.shape_cast %5 : vector<1x4x256xf32> to vector<4x256xf32>
    %cst_9 = arith.constant dense<0.000000e+00> : vector<4x256xf32>
    %7 = tpu.matmul %4, %6, %cst_9 {dimension_numbers = #tpu.dot_dimension_numbers<[1], [0], [0], [1], [0, 0, 1, 1], [], []>} : vector<4x4xf32>, vector<4x256xf32>, vector<4x256xf32> -> vector<4x256xf32>
    %8 = arith.addf %3, %7 : vector<4x256xf32>
    %c0_10 = arith.constant 0 : index
    %c0_11 = arith.constant 0 : index
    %9 = vector.load %arg7[%c0_10, %c0_11] : memref<4x1xf32, #tpu.memory_space<vmem>>, vector<4x1xf32>
    %10 = vector.broadcast %9 : vector<4x1xf32> to vector<4x256xf32>
    %11 = arith.addf %8, %10 : vector<4x256xf32>
    %c0_12 = arith.constant 0 : index
    %c0_13 = arith.constant 0 : index
    %c0_14 = arith.constant 0 : index
    %12 = vector.load %arg8[%c0_12, %c0_13, %c0_14] : memref<1x4x256xf32, #tpu.memory_space<vmem>>, vector<1x4x256xf32>
    %13 = vector.shape_cast %12 : vector<1x4x256xf32> to vector<4x256xf32>
    %14 = vector.shape_cast %11 : vector<4x256xf32> to vector<1x4x256xf32>
    tpu.vector_store %arg8[%c0_12, %c0_13, %c0_14], %14 {strides = array<i32>} : memref<1x4x256xf32, #tpu.memory_space<vmem>>, vector<1x4x256xf32>,
    return
  }
  func.func @transform_0(%arg0: i32, %arg1: i32, %arg2: i32) -> (i32, i32, i32) {
    %c0_i32 = arith.constant 0 : i32
    %c0_i32_0 = arith.constant 0 : i32
    return %arg0, %c0_i32, %arg2 : i32, i32, i32
  }
  func.func @transform_1(%arg0: i32, %arg1: i32, %arg2: i32) -> (i32, i32, i32) {
    %c0_i32 = arith.constant 0 : i32
    %c0_i32_0 = arith.constant 0 : i32
    return %arg0, %c0_i32, %arg2 : i32, i32, i32
  }
  func.func @transform_2(%arg0: i32, %arg1: i32, %arg2: i32) -> (i32, i32) {
    %c0_i32 = arith.constant 0 : i32
    %c0_i32_0 = arith.constant 0 : i32
    return %arg1, %c0_i32 : i32, i32
  }
  func.func @transform_3(%arg0: i32, %arg1: i32, %arg2: i32) -> (i32, i32) {
    %c0_i32 = arith.constant 0 : i32
    %c0_i32_0 = arith.constant 0 : i32
    return %arg1, %c0_i32 : i32, i32
  }
  func.func @transform_4(%arg0: i32, %arg1: i32, %arg2: i32) -> (i32, i32) {
    %c0_i32 = arith.constant 0 : i32
    %c0_i32_0 = arith.constant 0 : i32
    return %arg1, %c0_i32 : i32, i32
  }
  func.func @transform_5(%arg0: i32, %arg1: i32, %arg2: i32) -> (i32, i32, i32) {
    %c0_i32 = arith.constant 0 : i32
    return %arg0, %arg1, %arg2 : i32, i32, i32
  }
}

</mosaic_0001>

<llo_original>
// kernel: tpu_custom_call.1
$region0: #{tpu_custom_call.1}
  #allocation0 [shape = 'u32[]', space=smem, size = 0x4, offset = 0x4, fixed_abs, tag = 'smem constant byte address 0x4 - core index']
  #allocation1 [shape = 'u32[144,128]{1,0:T(1,128)}', space=vmem, size = 0x12000, scoped, tag = 'internal scratch']
  %s0 = inlined_call_operand.hbm [shape: f32[2,4,256], index: 0, kind: input, shape index: {}]
  %s1 = inlined_call_operand.hbm [shape: f32[2,4,256], index: 1, kind: input, shape index: {}]
  %s2 = inlined_call_operand.vmem [shape: f32[4,4], index: 2, kind: input, shape index: {}]
  %s3 = inlined_call_operand.vmem [shape: f32[4,4], index: 3, kind: input, shape index: {}]
  %s4 = inlined_call_operand.vmem [shape: f32[4,1], index: 4, kind: input, shape index: {}]
  %s5 = inlined_call_operand.hbm [shape: f32[2,4,256], index: 5, kind: output, shape index: {}]
  %s6 = sld [smem:[#allocation0]]
  $region61: #{tpu_custom_call.1} parent=0
    _
  %s8 = ssub.s32 1, %s6
  %s9 = scalar_select 0, %s8, %s6
  $region1: #{tpu_custom_call.1} parent=0
    #allocation2 [shape = 'u8[8192]{0}', space=vmem, size = 0x2000, scoped, tag = 'input window, operand 0']
    #allocation3 [shape = 's32[2]{0}', space=sflag, size = 0x8, scoped, tag = 'scoped memory for tpu_custom_call.1']
    #allocation4 [shape = 's32[2]{0}', space=sflag, size = 0x8, scoped, tag = 'scoped memory for tpu_custom_call.1']
    #allocation5 [shape = 'u8[8192]{0}', space=vmem, size = 0x2000, scoped, tag = 'input window, operand 1']
    #allocation6 [shape = 's32[2]{0}', space=sflag, size = 0x8, scoped, tag = 'scoped memory for tpu_custom_call.1']
    #allocation7 [shape = 'u8[8192]{0}', space=vmem, size = 0x2000, scoped, tag = 'output window, operand 0']
    %10 = vsyncpa [#allocation3], 0
    %s11 = scalar_lea.sflag [#allocation3], 1
    %12 = vsyncpa %s11, 0
    %13 = vsyncpa [#allocation6], 0
    %s14 = scalar_lea.sflag [#allocation6], 1
    %15 = vsyncpa %s14, 0
    %16 = vsyncpa [#allocation4], 0
    %s17 = scalar_lea.sflag [#allocation4], 1
    %18 = vsyncpa %s17, 0
    loop: start=0, step=1, limit=4
    $region2: #{tpu_custom_call.1} parent=1 // loop_pre_header
      _
    $region3: #{tpu_custom_call.1} parent=1 // loop_header
      %s20 = sphi 0, %s24
      %p21 = scmp.ge.s32.totalorder %s20, 4
      %s27 = sphi 0, %s46
      %s28 = sphi 0, %s42
      %s29 = sphi 0, %s38
      %s30 = sphi 0, %s27
      %s31 = sphi 0, %s28
      %s32 = sphi 0, %s29
      %s33 = sphi 0, %s30
      %s34 = sphi 0, %s31
      %s35 = sphi 0, %s32
      %s51 = sphi 0, %s53
      %s54 = sphi 0, %s51
      %s55 = sphi 0, %s54
      %s71 = sphi 0, %s55
      %s79 = sphi 0, %s81
      %s82 = sphi 0, %s79
      %s83 = sphi 0, %s82
      %s99 = sphi 0, %s83
      %s105 = sphi 0, %s107
      %s108 = sphi 0, %s105
      %s109 = sphi 0, %s108
      %s125 = sphi 0, %s109
      %s131 = sphi 0, %s133
      %s134 = sphi 0, %s131
      %s135 = sphi 0, %s134
      %s151 = sphi 0, %s135
      %s157 = sphi 0, %s159
      %s160 = sphi 0, %s157
      %s161 = sphi 0, %s160
      %s177 = sphi 0, %s161
      %s187 = sphi 0, %s189
      %s190 = sphi 0, %s187
      %s191 = sphi 0, %s190
      %s207 = sphi 0, %s191
    $region4: #{tpu_custom_call.1} parent=1 // loop_header_branch
      %23 = sbr.rel (%p21) target = $region8
    $region5: #{tpu_custom_call.1} parent=1 // loop_body
      %s25 = ssub.s32 %s20, 1
      %s26 = ssub.s32 %s20, 2
      %s36 = sadd.s32 1, %s29
      %p37 = scmp.ge.s32.totalorder %s36, 1
      %s38 = scalar_select %p37, 0, %s36
      %s39 = sadd.s32 1, %s28
      %s40 = scalar_select %p37, %s39, %s28
      %p41 = scmp.ge.s32.totalorder %s40, 1
      %s42 = scalar_select %p41, 0, %s40
      %s43 = sadd.s32 1, %s27
      %s44 = scalar_select %p41, %s43, %s27
      %p45 = scmp.ge.s32.totalorder %s44, 2
      %s46 = scalar_select %p45, 0, %s44
      %s47 = ssub.s32 %s27, %s46
      %s48 = ssub.s32 %s29, %s38
      %s49 = sor.u32 %s47, %s48
      %p50 = scmp.eq.s32.totalorder %s49, 0
      %s52 = sadd.s32 %s51, 1
      %s53 = scalar_select %p50, %s51, %s52
      %p56 = pneg %p50
      %p57 = scmp.eq.s32.totalorder %s20, 1
      %p58 = por %p56, %p57
      %p59 = scmp.ne.s32.totalorder %s51, %s54
      %p60 = scmp.eq.s32.totalorder %s20, 0
      %p61 = por %p59, %p60
      %p62 = scmp.ne.s32.totalorder %s51, %s54
      %p63 = scmp.eq.s32.totalorder %s25, 1
      %p64 = por %p62, %p63
      %p65 = scmp.ne.s32.totalorder %s54, %s55
      %p66 = scmp.eq.s32.totalorder %s25, 0
      %p67 = por %p65, %p66
      %p68 = scmp.ne.s32.totalorder %s54, %s55
      %p69 = scmp.eq.s32.totalorder %s26, 1
      %p70 = por %p68, %p69
      %p72 = scmp.ne.s32.totalorder %s55, %s71
      %p73 = scmp.eq.s32.totalorder %s26, 0
      %p74 = por %p72, %p73
      %s75 = ssub.s32 %s27, %s46
      %s76 = ssub.s32 %s29, %s38
      %s77 = sor.u32 %s75, %s76
      %p78 = scmp.eq.s32.totalorder %s77, 0
      %s80 = sadd.s32 %s79, 1
      %s81 = scalar_select %p78, %s79, %s80
      %p84 = pneg %p78
      %p85 = scmp.eq.s32.totalorder %s20, 1
      %p86 = por %p84, %p85
      %p87 = scmp.ne.s32.totalorder %s79, %s82
      %p88 = scmp.eq.s32.totalorder %s20, 0
      %p89 = por %p87, %p88
      %p90 = scmp.ne.s32.totalorder %s79, %s82
      %p91 = scmp.eq.s32.totalorder %s25, 1
      %p92 = por %p90, %p91
      %p93 = scmp.ne.s32.totalorder %s82, %s83
      %p94 = scmp.eq.s32.totalorder %s25, 0
      %p95 = por %p93, %p94
      %p96 = scmp.ne.s32.totalorder %s82, %s83
      %p97 = scmp.eq.s32.totalorder %s26, 1
      %p98 = por %p96, %p97
      %p100 = scmp.ne.s32.totalorder %s83, %s99
      %p101 = scmp.eq.s32.totalorder %s26, 0
      %p102 = por %p100, %p101
      %s103 = ssub.s32 %s28, %s42
      %p104 = scmp.eq.s32.totalorder %s103, 0
      %s106 = sadd.s32 %s105, 1
      %s107 = scalar_select %p104, %s105, %s106
      %p110 = pneg %p104
      %p111 = scmp.eq.s32.totalorder %s20, 1
      %p112 = por %p110, %p111
      %p113 = scmp.ne.s32.totalorder %s105, %s108
      %p114 = scmp.eq.s32.totalorder %s20, 0
      %p115 = por %p113, %p114
      %p116 = scmp.ne.s32.totalorder %s105, %s108
      %p117 = scmp.eq.s32.totalorder %s25, 1
      %p118 = por %p116, %p117
      %p119 = scmp.ne.s32.totalorder %s108, %s109
      %p120 = scmp.eq.s32.totalorder %s25, 0
      %p121 = por %p119, %p120
      %p122 = scmp.ne.s32.totalorder %s108, %s109
      %p123 = scmp.eq.s32.totalorder %s26, 1
      %p124 = por %p122, %p123
      %p126 = scmp.ne.s32.totalorder %s109, %s125
      %p127 = scmp.eq.s32.totalorder %s26, 0
      %p128 = por %p126, %p127
      %s129 = ssub.s32 %s28, %s42
      %p130 = scmp.eq.s32.totalorder %s129, 0
      %s132 = sadd.s32 %s131, 1
      %s133 = scalar_select %p130, %s131, %s132
      %p136 = pneg %p130
      %p137 = scmp.eq.s32.totalorder %s20, 1
      %p138 = por %p136, %p137
      %p139 = scmp.ne.s32.totalorder %s131, %s134
      %p140 = scmp.eq.s32.totalorder %s20, 0
      %p141 = por %p139, %p140
      %p142 = scmp.ne.s32.totalorder %s131, %s134
      %p143 = scmp.eq.s32.totalorder %s25, 1
      %p144 = por %p142, %p143
      %p145 = scmp.ne.s32.totalorder %s134, %s135
      %p146 = scmp.eq.s32.totalorder %s25, 0
      %p147 = por %p145, %p146
      %p148 = scmp.ne.s32.totalorder %s134, %s135
      %p149 = scmp.eq.s32.totalorder %s26, 1
      %p150 = por %p148, %p149
      %p152 = scmp.ne.s32.totalorder %s135, %s151
      %p153 = scmp.eq.s32.totalorder %s26, 0
      %p154 = por %p152, %p153
      %s155 = ssub.s32 %s28, %s42
      %p156 = scmp.eq.s32.totalorder %s155, 0
      %s158 = sadd.s32 %s157, 1
      %s159 = scalar_select %p156, %s157, %s158
      %p162 = pneg %p156
      %p163 = scmp.eq.s32.totalorder %s20, 1
      %p164 = por %p162, %p163
      %p165 = scmp.ne.s32.totalorder %s157, %s160
      %p166 = scmp.eq.s32.totalorder %s20, 0
      %p167 = por %p165, %p166
      %p168 = scmp.ne.s32.totalorder %s157, %s160
      %p169 = scmp.eq.s32.totalorder %s25, 1
      %p170 = por %p168, %p169
      %p171 = scmp.ne.s32.totalorder %s160, %s161
      %p172 = scmp.eq.s32.totalorder %s25, 0
      %p173 = por %p171, %p172
      %p174 = scmp.ne.s32.totalorder %s160, %s161
      %p175 = scmp.eq.s32.totalorder %s26, 1
      %p176 = por %p174, %p175
      %p178 = scmp.ne.s32.totalorder %s161, %s177
      %p179 = scmp.eq.s32.totalorder %s26, 0
      %p180 = por %p178, %p179
      %s181 = ssub.s32 %s27, %s46
      %s182 = ssub.s32 %s28, %s42
      %s183 = sor.u32 %s181, %s182
      %s184 = ssub.s32 %s29, %s38
      %s185 = sor.u32 %s183, %s184
      %p186 = scmp.eq.s32.totalorder %s185, 0
      %s188 = sadd.s32 %s187, 1
      %s189 = scalar_select %p186, %s187, %s188
      %p192 = pneg %p186
      %p193 = scmp.eq.s32.totalorder %s20, 1
      %p194 = por %p192, %p193
      %p195 = scmp.ne.s32.totalorder %s187, %s190
      %p196 = scmp.eq.s32.totalorder %s20, 0
      %p197 = por %p195, %p196
      %p198 = scmp.ne.s32.totalorder %s187, %s190
      %p199 = scmp.eq.s32.totalorder %s25, 1
      %p200 = por %p198, %p199
      %p201 = scmp.ne.s32.totalorder %s190, %s191
      %p202 = scmp.eq.s32.totalorder %s25, 0
      %p203 = por %p201, %p202
      %p204 = scmp.ne.s32.totalorder %s190, %s191
      %p205 = scmp.eq.s32.totalorder %s26, 1
      %p206 = por %p204, %p205
      %p208 = scmp.ne.s32.totalorder %s191, %s207
      %p209 = scmp.eq.s32.totalorder %s26, 0
      %p210 = por %p208, %p209
      %p211 = scmp.le.s32.totalorder 1, %s20
      %p212 = scmp.lt.s32.totalorder %s20, 3
      %p213 = pnand %p211, %p212
      %p214 = pneg %p213
      // Predicated region
      $region9: #{tpu_custom_call.1} parent=5 // pred_check
        _
      $region10: #{tpu_custom_call.1} parent=5 // pred_check_branch
        %216 = sbr.rel (%p213) target = $region12
      $region11: #{tpu_custom_call.1} parent=5 // pred_region
        %s217 = ssub.s32 %s20, 1
        // Predicated region
        $region13: #{tpu_custom_call.1} parent=11 // pred_check
          %p218 = pneg %p121
        $region14: #{tpu_custom_call.1} parent=11 // pred_check_branch
          %220 = sbr.rel (%p218) target = $region16
        $region15: #{tpu_custom_call.1} parent=11 // pred_region
          %p221 = scmp.lt.s32.totalorder %s31, 0
          %s222 = scalar_select %p221, %s31, 0
          %s223 = smul.addr %s222, 4
          %s224 = scalar_lea.vmem %s2, %s223
        $region16: #{tpu_custom_call.1} parent=11 // pred_fallthru
          _
        // Predicated region
        $region17: #{tpu_custom_call.1} parent=11 // pred_check
          %p225 = pneg %p147
        $region18: #{tpu_custom_call.1} parent=11 // pred_check_branch
          %227 = sbr.rel (%p225) target = $region20
        $region19: #{tpu_custom_call.1} parent=11 // pred_region
          %p228 = scmp.lt.s32.totalorder %s31, 0
          %s229 = scalar_select %p228, %s31, 0
          %s230 = smul.addr %s229, 4
          %s231 = scalar_lea.vmem %s3, %s230
        $region20: #{tpu_custom_call.1} parent=11 // pred_fallthru
          _
        // Predicated region
        $region21: #{tpu_custom_call.1} parent=11 // pred_check
          %p232 = pneg %p173
        $region22: #{tpu_custom_call.1} parent=11 // pred_check_branch
          %234 = sbr.rel (%p232) target = $region24
        $region23: #{tpu_custom_call.1} parent=11 // pred_region
          %p235 = scmp.lt.s32.totalorder %s31, 0
          %s236 = scalar_select %p235, %s31, 0
          %s237 = smul.addr %s236, 4
          %s238 = scalar_lea.vmem %s4, %s237
        $region24: #{tpu_custom_call.1} parent=11 // pred_fallthru
          _
      $region12: #{tpu_custom_call.1} parent=5 // pred_fallthru
        _
      %p239 = scmp.lt.s32.totalorder %s20, 2
      // Predicated region
      $region25: #{tpu_custom_call.1} parent=5 // pred_check
        %p240 = pneg %p239
      $region26: #{tpu_custom_call.1} parent=5 // pred_check_branch
        %242 = sbr.rel (%p240) target = $region28
      $region27: #{tpu_custom_call.1} parent=5 // pred_region
        // Predicated region
        $region29: #{tpu_custom_call.1} parent=27 // pred_check
          %p243 = pneg %p61
        $region30: #{tpu_custom_call.1} parent=27 // pred_check_branch
          %245 = sbr.rel (%p243) target = $region32
        $region31: #{tpu_custom_call.1} parent=27 // pred_region
          %s246 = sand.u32 %s51, 1
          %s247 = scalar_lea.sflag [#allocation3], %s246
          %s248 = sand.u32 %s51, 1
          %s249 = smul.addr %s248, 8
          %s250 = scalar_lea.vmem [#allocation2], %s249
          %s251 = smul.u32 2, %s29
          %s253 = ssub.s32 128, 128
          %254 = vsyncadd %s247, %s253
          %s255 = smul.addr %s27, 2
          %s256 = sadd.s32 %s251, %s255
          %s257 = smul.addr %s256, 64
          %s258 = scalar_lea.hbm %s0, %s257
          %s260 = sshll.u32 %s250, 4
          %s261 = int_to_ptr.vmem [resolvable:$true] %s260
          %263 = dma.hbm_to_vmem [thread:$0]  %s258, 128, %s261, %s247
        $region32: #{tpu_custom_call.1} parent=27 // pred_fallthru
          _
        // Predicated region
        $region33: #{tpu_custom_call.1} parent=27 // pred_check
          %p264 = pneg %p89
        $region34: #{tpu_custom_call.1} parent=27 // pred_check_branch
          %266 = sbr.rel (%p264) target = $region36
        $region35: #{tpu_custom_call.1} parent=27 // pred_region
          %s267 = sand.u32 %s79, 1
          %s268 = scalar_lea.sflag [#allocation6], %s267
          %s269 = sand.u32 %s79, 1
          %s270 = smul.addr %s269, 8
          %s271 = scalar_lea.vmem [#allocation5], %s270
          %s272 = smul.u32 2, %s29
          %s274 = ssub.s32 128, 128
          %275 = vsyncadd %s268, %s274
          %s276 = smul.addr %s27, 2
          %s277 = sadd.s32 %s272, %s276
          %s278 = smul.addr %s277, 64
          %s279 = scalar_lea.hbm %s1, %s278
          %s281 = sshll.u32 %s271, 4
          %s282 = int_to_ptr.vmem [resolvable:$true] %s281
          %284 = dma.hbm_to_vmem [thread:$0]  %s279, 128, %s282, %s268
        $region36: #{tpu_custom_call.1} parent=27 // pred_fallthru
          _
      $region28: #{tpu_custom_call.1} parent=5 // pred_fallthru
        _
      %p285 = scmp.le.s32.totalorder 1, %s20
      %p286 = scmp.lt.s32.totalorder %s20, 3
      %p287 = pnand %p285, %p286
      %p288 = pneg %p287
      // Predicated region
      $region37: #{tpu_custom_call.1} parent=5 // pred_check
        _
      $region38: #{tpu_custom_call.1} parent=5 // pred_check_branch
        %290 = sbr.rel (%p287) target = $region40
      $region39: #{tpu_custom_call.1} parent=5 // pred_region
        %s291 = ssub.s32 %s20, 1
        %s292 = sand.u32 %s54, 1
        %s293 = scalar_lea.sflag [#allocation3], %s292
        %s294 = sand.u32 %s54, 1
        %s295 = smul.addr %s294, 8
        %s296 = scalar_lea.vmem [#allocation2], %s295
        // Predicated region
        $region41: #{tpu_custom_call.1} parent=39 // pred_check
          %p297 = pneg %p67
        $region42: #{tpu_custom_call.1} parent=39 // pred_check_branch
          %299 = sbr.rel (%p297) target = $region44
        $region43: #{tpu_custom_call.1} parent=39 // pred_region
          %300 = dma.done %s293, 128
        $region44: #{tpu_custom_call.1} parent=39 // pred_fallthru
          _
        %s301 = sand.u32 %s82, 1
        %s302 = scalar_lea.sflag [#allocation6], %s301
        %s303 = sand.u32 %s82, 1
        %s304 = smul.addr %s303, 8
        %s305 = scalar_lea.vmem [#allocation5], %s304
        // Predicated region
        $region45: #{tpu_custom_call.1} parent=39 // pred_check
          %p306 = pneg %p95
        $region46: #{tpu_custom_call.1} parent=39 // pred_check_branch
          %308 = sbr.rel (%p306) target = $region48
        $region47: #{tpu_custom_call.1} parent=39 // pred_region
          %309 = dma.done %s302, 128
        $region48: #{tpu_custom_call.1} parent=39 // pred_fallthru
          _
        %s310 = sand.u32 %s54, 1
        %s311 = scalar_lea.sflag [#allocation3], %s310
        %s312 = sand.u32 %s54, 1
        %s313 = smul.addr %s312, 8
        %s314 = scalar_lea.vmem [#allocation2], %s313
        %p315 = pneg %p67
        %p316 = pneg %p64
        %s317 = sand.u32 %s82, 1
        %s318 = scalar_lea.sflag [#allocation6], %s317
        %s319 = sand.u32 %s82, 1
        %s320 = smul.addr %s319, 8
        %s321 = scalar_lea.vmem [#allocation5], %s320
        %p322 = pneg %p95
        %p323 = pneg %p92
        %p324 = scmp.lt.s32.totalorder %s31, 0
        %s325 = scalar_select %p324, %s31, 0
        %s326 = smul.addr %s325, 4
        %s327 = scalar_lea.vmem %s2, %s326
        %p328 = pneg %p121
        %p329 = pneg %p118
        %p330 = scmp.lt.s32.totalorder %s31, 0
        %s331 = scalar_select %p330, %s31, 0
        %s332 = smul.addr %s331, 4
        %s333 = scalar_lea.vmem %s3, %s332
        %p334 = pneg %p147
        %p335 = pneg %p144
        %p336 = scmp.lt.s32.totalorder %s31, 0
        %s337 = scalar_select %p336, %s31, 0
        %s338 = smul.addr %s337, 4
        %s339 = scalar_lea.vmem %s4, %s338
        %p340 = pneg %p173
        %p341 = pneg %p170
        %p342 = pneg %p203
        %p343 = pneg %p200
        %s344 = sand.u32 %s190, 1
        %s345 = scalar_lea.sflag [#allocation4], %s344
        %s346 = sand.u32 %s190, 1
        %s347 = smul.addr %s346, 8
        %s348 = scalar_lea.vmem [#allocation7], %s347
        %s349 = smul.u32 2, %s32
        %s350 = smul.u32 2, %s32
        %p351 = scmp.lt.s32.totalorder %s31, 0
        %s352 = scalar_select %p351, %s31, 0
        %s353 = smul.addr %s352, 4
        %s354 = scalar_lea.vmem %s2, %s353
        %p355 = scmp.lt.s32.totalorder %s31, 0
        %s356 = scalar_select %p355, %s31, 0
        %s357 = smul.addr %s356, 4
        %s358 = scalar_lea.vmem %s3, %s357
        %p359 = scmp.lt.s32.totalorder %s31, 0
        %s360 = scalar_select %p359, %s31, 0
        %s361 = smul.addr %s360, 4
        %s362 = scalar_lea.vmem %s4, %s361
        %s363 = smul.u32 2, %s32
        %v364 = vld [vmem:[%s354] sm:$0xf]
        %v365 = vld [vmem:[%s296] sm:$0xff]
        %v366 = vld [vmem:[%s358] sm:$0xf]
        %v367 = vld [vmem:[%s305] sm:$0xff]
        %v369 = vcombine.high %v367, %v367
        %vm370 = vcmask 31744
        %v372 = vsel %vm370, %v366, 0
        %vm374 = vcmask 1043456
        %v375 = vsel %vm374, %v367, 0
        %v377 = vsel %vm374, %v369, 0
        %379 = vmatprep.subr.mxu0 %v377
        %380 = vmatpush1.msra.mxu0 %v375
        %381 = vmatprep.subr.mxu0 0.0
        %382 = vmatpush1.msra.mxu0 0.0
        %383 = vmatprep.subr.mxu0 0.0
        %384 = vmatpush1.msra.mxu0 0.0
        %385 = vmatprep.subr.mxu0 0.0
        %386 = vmatpush1.msra.mxu0 0.0
        %387 = vmatprep.subr.mxu0 0.0
        %388 = vmatpush1.msra.mxu0 0.0
        %389 = vmatprep.subr.mxu0 0.0
        %390 = vmatpush1.msra.mxu0 0.0
        %391 = vmatprep.subr.mxu0 0.0
        %392 = vmatpush1.msra.mxu0 0.0
        %393 = vmatprep.subr.mxu0 0.0
        %394 = vmatpush1.msra.mxu0 0.0
        %395 = vmatprep.subr.mxu0 0.0
        %396 = vmatpush1.msra.mxu0 0.0
        %397 = vmatprep.subr.mxu0 0.0
        %398 = vmatpush1.msra.mxu0 0.0
        %399 = vmatprep.subr.mxu0 0.0
        %400 = vmatpush1.msra.mxu0 0.0
        %401 = vmatprep.subr.mxu0 0.0
        %402 = vmatpush1.msra.mxu0 0.0
        %403 = vmatprep.subr.mxu0 0.0
        %404 = vmatpush1.msra.mxu0 0.0
        %405 = vmatprep.subr.mxu0 0.0
        %406 = vmatpush1.msra.mxu0 0.0
        %407 = vmatprep.subr.mxu0 0.0
        %408 = vmatpush1.msra.mxu0 0.0
        %409 = vmatprep.subr.mxu0 0.0
        %410 = vmatpush1.msra.mxu0 0.0
        %411 = vmatprep.subr.mxu0 0.0
        %412 = vmatpush1.msra.mxu0 0.0
        %413 = vmatprep.subr.mxu0 0.0
        %414 = vmatpush1.msra.mxu0 0.0
        %415 = vmatprep.subr.mxu0 0.0
        %416 = vmatpush1.msra.mxu0 0.0
        %417 = vmatprep.subr.mxu0 0.0
        %418 = vmatpush1.msra.mxu0 0.0
        %419 = vmatprep.subr.mxu0 0.0
        %420 = vmatpush1.msra.mxu0 0.0
        %421 = vmatprep.subr.mxu0 0.0
        %422 = vmatpush1.msra.mxu0 0.0
        %423 = vmatprep.subr.mxu0 0.0
        %424 = vmatpush1.msra.mxu0 0.0
        %425 = vmatprep.subr.mxu0 0.0
        %426 = vmatpush1.msra.mxu0 0.0
        %427 = vmatprep.subr.mxu0 0.0
        %428 = vmatpush1.msra.mxu0 0.0
        %429 = vmatprep.subr.mxu0 0.0
        %430 = vmatpush1.msra.mxu0 0.0
        %431 = vmatprep.subr.mxu0 0.0
        %432 = vmatpush1.msra.mxu0 0.0
        %433 = vmatprep.subr.mxu0 0.0
        %434 = vmatpush1.msra.mxu0 0.0
        %435 = vmatprep.subr.mxu0 0.0
        %436 = vmatpush1.msra.mxu0 0.0
        %437 = vmatprep.subr.mxu0 0.0
        %438 = vmatpush1.msra.mxu0 0.0
        %439 = vmatprep.subr.mxu0 0.0
        %440 = vmatpush1.msra.mxu0 0.0
        %441 = vmatprep.subr.mxu0 0.0
        %442 = vmatpush1.msra.mxu0 0.0
        %443 = vmatprep.mubr.f32.mxu0 0.0
        %444 = vmatmul.mubr.f32.gmra.mrb[0].mxu0 %v372
        %v445 = vpop.f32.mrb[0].mxu0
        %v446 = vadd.f32 0.0, %v445
        %v447 = vpop.f32.mrb[0].mxu0
        %v448 = vadd.f32 0.0, %v447
        %449 = vdwg.mxu0
        %v451 = vcombine.high %v365, %v365
        %v453 = vsel %vm370, %v364, 0
        %v455 = vsel %vm374, %v365, 0
        %v457 = vsel %vm374, %v451, 0
        %459 = vmatprep.subr.mxu0 %v457
        %460 = vmatpush1.msra.mxu0 %v455
        %461 = vmatprep.subr.mxu0 0.0
        %462 = vmatpush1.msra.mxu0 0.0
        %463 = vmatprep.subr.mxu0 0.0
        %464 = vmatpush1.msra.mxu0 0.0
        %465 = vmatprep.subr.mxu0 0.0
        %466 = vmatpush1.msra.mxu0 0.0
        %467 = vmatprep.subr.mxu0 0.0
        %468 = vmatpush1.msra.mxu0 0.0
        %469 = vmatprep.subr.mxu0 0.0
        %470 = vmatpush1.msra.mxu0 0.0
        %471 = vmatprep.subr.mxu0 0.0
        %472 = vmatpush1.msra.mxu0 0.0
        %473 = vmatprep.subr.mxu0 0.0
        %474 = vmatpush1.msra.mxu0 0.0
        %475 = vmatprep.subr.mxu0 0.0
        %476 = vmatpush1.msra.mxu0 0.0
        %477 = vmatprep.subr.mxu0 0.0
        %478 = vmatpush1.msra.mxu0 0.0
        %479 = vmatprep.subr.mxu0 0.0
        %480 = vmatpush1.msra.mxu0 0.0
        %481 = vmatprep.subr.mxu0 0.0
        %482 = vmatpush1.msra.mxu0 0.0
        %483 = vmatprep.subr.mxu0 0.0
        %484 = vmatpush1.msra.mxu0 0.0
        %485 = vmatprep.subr.mxu0 0.0
        %486 = vmatpush1.msra.mxu0 0.0
        %487 = vmatprep.subr.mxu0 0.0
        %488 = vmatpush1.msra.mxu0 0.0
        %489 = vmatprep.subr.mxu0 0.0
        %490 = vmatpush1.msra.mxu0 0.0
        %491 = vmatprep.subr.mxu0 0.0
        %492 = vmatpush1.msra.mxu0 0.0
        %493 = vmatprep.subr.mxu0 0.0
        %494 = vmatpush1.msra.mxu0 0.0
        %495 = vmatprep.subr.mxu0 0.0
        %496 = vmatpush1.msra.mxu0 0.0
        %497 = vmatprep.subr.mxu0 0.0
        %498 = vmatpush1.msra.mxu0 0.0
        %499 = vmatprep.subr.mxu0 0.0
        %500 = vmatpush1.msra.mxu0 0.0
        %501 = vmatprep.subr.mxu0 0.0
        %502 = vmatpush1.msra.mxu0 0.0
        %503 = vmatprep.subr.mxu0 0.0
        %504 = vmatpush1.msra.mxu0 0.0
        %505 = vmatprep.subr.mxu0 0.0
        %506 = vmatpush1.msra.mxu0 0.0
        %507 = vmatprep.subr.mxu0 0.0
        %508 = vmatpush1.msra.mxu0 0.0
        %509 = vmatprep.subr.mxu0 0.0
        %510 = vmatpush1.msra.mxu0 0.0
        %511 = vmatprep.subr.mxu0 0.0
        %512 = vmatpush1.msra.mxu0 0.0
        %513 = vmatprep.subr.mxu0 0.0
        %514 = vmatpush1.msra.mxu0 0.0
        %515 = vmatprep.subr.mxu0 0.0
        %516 = vmatpush1.msra.mxu0 0.0
        %517 = vmatprep.subr.mxu0 0.0
        %518 = vmatpush1.msra.mxu0 0.0
        %519 = vmatprep.subr.mxu0 0.0
        %520 = vmatpush1.msra.mxu0 0.0
        %521 = vmatprep.subr.mxu0 0.0
        %522 = vmatpush1.msra.mxu0 0.0
        %523 = vmatprep.mubr.f32.mxu0 0.0
        %524 = vmatmul.mubr.f32.gmra.mrb[0].mxu0 %v453
        %v525 = vpop.f32.mrb[0].mxu0
        %v526 = vadd.f32 %v446, %v525
        %v527 = vpop.f32.mrb[0].mxu0
        %v528 = vadd.f32 %v448, %v527
        %529 = vdwg.mxu0
        %v530 = vld [vmem:[%s362] sm:$0xf]
        %532 = vset.pattern.permute.xlu0 0
        %533 = vperm.xlu0 %532, %v530
        %v534 = vpop.permute.xlu0 %533
        %v536 = vadd.f32 %v526, %v534
        %v537 = vadd.f32 %v528, %v534
        %v540 = vcombine.low %v536, %v537
        %542 = vst [vmem:[%s348] sm:$0xff] %v540
        %s543 = sand.u32 %s190, 1
        %s544 = scalar_lea.sflag [#allocation4], %s543
        %s545 = sand.u32 %s190, 1
        %s546 = smul.addr %s545, 8
        %s547 = scalar_lea.vmem [#allocation7], %s546
        // Predicated region
        $region49: #{tpu_custom_call.1} parent=39 // pred_check
          %p548 = pneg %p200
        $region50: #{tpu_custom_call.1} parent=39 // pred_check_branch
          %550 = sbr.rel (%p548) target = $region52
        $region51: #{tpu_custom_call.1} parent=39 // pred_region
          %s551 = smul.u32 2, %s32
          %s553 = ssub.s32 128, 128
          %554 = vsyncadd %s544, %s553
          %s555 = smul.addr %s31, 2
          %s556 = sadd.s32 %s551, %s555
          %s557 = smul.addr %s30, 2
          %s558 = sadd.s32 %s556, %s557
          %s559 = smul.addr %s558, 64
          %s560 = scalar_lea.hbm %s5, %s559
          %s562 = sshll.u32 %s547, 4
          %s563 = int_to_ptr.vmem [resolvable:$true] %s562
          %565 = dma.vmem_to_hbm [thread:$0]  %s563, 128, %s560, %s544
        $region52: #{tpu_custom_call.1} parent=39 // pred_fallthru
          _
      $region40: #{tpu_custom_call.1} parent=5 // pred_fallthru
        _
      %p566 = scmp.le.s32.totalorder 2, %s20
      // Predicated region
      $region53: #{tpu_custom_call.1} parent=5 // pred_check
        %p567 = pneg %p566
      $region54: #{tpu_custom_call.1} parent=5 // pred_check_branch
        %569 = sbr.rel (%p567) target = $region56
      $region55: #{tpu_custom_call.1} parent=5 // pred_region
        %s570 = ssub.s32 %s20, 2
        // Predicated region
        $region57: #{tpu_custom_call.1} parent=55 // pred_check
          %p571 = pneg %p206
        $region58: #{tpu_custom_call.1} parent=55 // pred_check_branch
          %573 = sbr.rel (%p571) target = $region60
        $region59: #{tpu_custom_call.1} parent=55 // pred_region
          %s574 = sand.u32 %s191, 1
          %s575 = scalar_lea.sflag [#allocation4], %s574
          %s576 = sand.u32 %s191, 1
          %s577 = smul.addr %s576, 8
          %s578 = scalar_lea.vmem [#allocation7], %s577
          %579 = dma.done %s575, 128
        $region60: #{tpu_custom_call.1} parent=55 // pred_fallthru
          _
      $region56: #{tpu_custom_call.1} parent=5 // pred_fallthru
        _
    $region6: #{tpu_custom_call.1} parent=1 // loop_footer
      %s24 = sadd.s32 1, %s20
    $region7: #{tpu_custom_call.1} parent=1 // loop_footer_branch
      %19 = sbr.rel target = $region3
    $region8: #{tpu_custom_call.1} parent=1 // loop_exit
      _
    %580 = vsyncpa [#allocation3], 1
    %s581 = scalar_lea.sflag [#allocation3], 1
    %582 = vsyncpa %s581, 1
    %583 = vsyncpa [#allocation6], 1
    %s584 = scalar_lea.sflag [#allocation6], 1
    %585 = vsyncpa %s584, 1
    %586 = vsyncpa [#allocation4], 1
    %s587 = scalar_lea.sflag [#allocation4], 1
    %588 = vsyncpa %s587, 1

</llo_original>
